<compile_context>
chip_gen: v7x
topology: tpu7x:2x2x1
jax: 0.10.0
libtpu: 0.0.40
codegen_flags: <defaults>
</compile_context>

<pallas_src>
import functools

import jax
import jax.numpy as jnp
from jax.experimental import pallas as pl
from jax.experimental.pallas import tpu as pltpu


def _round_up(a, b):
    return ((a + b - 1) // b) * b


def _npcc_kernel(x_ref, y_ref, npcc_ref,
                 sx_ref, sy_ref, sxx_ref, syy_ref, sxy_ref,
                 *, eps, n_spatial, spatial_tile, needs_mask):
    # x_ref / y_ref : (row_tile, spatial_tile) tiles in VMEM
    # npcc_ref      : (row_tile, 1) per-row pearson correlation (written at last k)
    # s*_ref        : (row_tile, 1) f32 moment accumulators (persist across k)
    k = pl.program_id(1)

    @pl.when(k == 0)
    def _init():
        sx_ref[...] = jnp.zeros_like(sx_ref)
        sy_ref[...] = jnp.zeros_like(sy_ref)
        sxx_ref[...] = jnp.zeros_like(sxx_ref)
        syy_ref[...] = jnp.zeros_like(syy_ref)
        sxy_ref[...] = jnp.zeros_like(sxy_ref)

    x = x_ref[...].astype(jnp.float32)
    y = y_ref[...].astype(jnp.float32)

    if needs_mask:
        # Last spatial tile extends past H*W: zero the out-of-range columns so
        # garbage (possibly NaN/Inf) never enters the moment sums.
        col = jax.lax.broadcasted_iota(jnp.int32, x.shape, 1)
        valid = (col + k * spatial_tile) < n_spatial
        x = jnp.where(valid, x, 0.0)
        y = jnp.where(valid, y, 0.0)

    # Single-pass moment accumulation (all in f32).
    sx_ref[...] += jnp.sum(x, axis=1, keepdims=True)
    sy_ref[...] += jnp.sum(y, axis=1, keepdims=True)
    sxx_ref[...] += jnp.sum(x * x, axis=1, keepdims=True)
    syy_ref[...] += jnp.sum(y * y, axis=1, keepdims=True)
    sxy_ref[...] += jnp.sum(x * y, axis=1, keepdims=True)

    @pl.when(k == pl.num_programs(1) - 1)
    def _finalize():
        inv_n = 1.0 / float(n_spatial)
        inv_nm1 = 1.0 / float(max(n_spatial - 1, 1))
        sx = sx_ref[...]
        sy = sy_ref[...]
        mean_x = sx * inv_n
        mean_y = sy * inv_n
        # numerator = E[(x - x̄)(y - ȳ)] = Σxy/n − x̄·ȳ
        cov = (sxy_ref[...] - sx * mean_y) * inv_n
        # unbiased variances (divide by N−1), matching torch.var(unbiased=True);
        # clamp at 0 to guard against cancellation in the moment formulation.
        var_x = jnp.maximum((sxx_ref[...] - sx * mean_x) * inv_nm1, 0.0)
        var_y = jnp.maximum((syy_ref[...] - sy * mean_y) * inv_nm1, 0.0)
        den = jnp.sqrt(var_x * var_y + eps)
        npcc_ref[...] = cov / (den + eps)


def npcc_loss(recon_amps, target_amps, eps=1e-8, row_tile=None, spatial_tile=None):
    """1 - mean(pearson_corr(recon, target)) over (B, C); corr over (H, W)."""
    B, C, H, W = recon_amps.shape
    assert target_amps.shape == (B, C, H, W)
    n_rows = B * C
    n_spatial = H * W

    x2d = recon_amps.reshape(n_rows, n_spatial)
    y2d = target_amps.reshape(n_rows, n_spatial)
    itemsize = x2d.dtype.itemsize  # bf16 inputs supported; kernel accumulates in f32

    # ---- spatial tiling: block size is independent of H*W --------------------
    MAX_SPATIAL_TILE = 8192  # multiple of 128
    if spatial_tile is None:
        spatial_tile = n_spatial if n_spatial <= MAX_SPATIAL_TILE else MAX_SPATIAL_TILE
    n_spatial_tiles = pl.cdiv(n_spatial, spatial_tile)
    needs_mask = (n_spatial % spatial_tile) != 0

    # ---- row tiling: ~2 MiB per input block, multiple of 8, and (when there
    # are enough rows) >= 2 row tiles so the parallel axis spans both v7x TCs.
    TARGET_BLOCK_BYTES = 2 * 1024 * 1024
    MAX_ROW_TILE = 1024
    if row_tile is None:
        if n_rows <= 8:
            row_tile = n_rows  # full row dim is always a legal block dim
        else:
            rt = TARGET_BLOCK_BYTES // max(1, spatial_tile * itemsize)
            rt = max(8, (rt // 8) * 8)
            rt = min(rt, MAX_ROW_TILE, max(8, (n_rows // 8) * 8))
            rt = min(rt, max(8, _round_up(pl.cdiv(n_rows, 2), 8)))
            row_tile = rt
    n_row_tiles = pl.cdiv(n_rows, row_tile)
    n_rows_padded = n_row_tiles * row_tile  # only the tiny output is padded; inputs are NOT copied

    kernel = functools.partial(
        _npcc_kernel,
        eps=float(eps),
        n_spatial=n_spatial,
        spatial_tile=spatial_tile,
        needs_mask=needs_mask,
    )

    npcc = pl.pallas_call(
        kernel,
        out_shape=jax.ShapeDtypeStruct((n_rows_padded, 1), jnp.float32),
        grid_spec=pltpu.PrefetchScalarGridSpec(
            num_scalar_prefetch=0,
            grid=(n_row_tiles, n_spatial_tiles),
            in_specs=[
                pl.BlockSpec((row_tile, spatial_tile), lambda i, k: (i, k)),
                pl.BlockSpec((row_tile, spatial_tile), lambda i, k: (i, k)),
            ],
            out_specs=pl.BlockSpec((row_tile, 1), lambda i, k: (i, 0)),
            scratch_shapes=[pltpu.VMEM((row_tile, 1), jnp.float32)] * 5,
        ),
        compiler_params=pltpu.CompilerParams(
            dimension_semantics=("parallel", "arbitrary"),
            vmem_limit_bytes=32 * 1024 * 1024,
        ),
        cost_estimate=pl.CostEstimate(
            flops=8 * n_rows * n_spatial,
            transcendentals=n_rows,
            bytes_accessed=2 * n_rows * n_spatial * itemsize + n_rows_padded * 4,
        ),
    )(x2d, y2d)

    npcc = npcc[:n_rows, 0]  # drop rows written by the (possibly) partial last row block
    return 1.0 - jnp.mean(npcc)


def _npcc_loss_ref(recon, target, eps=1e-8):
    # pure-JAX reference mirroring the PyTorch module
    rm = recon.mean(axis=(2, 3), keepdims=True)
    tm = target.mean(axis=(2, 3), keepdims=True)
    num = ((recon - rm) * (target - tm)).mean(axis=(2, 3))
    rv = recon.var(axis=(2, 3), ddof=1)
    tv = target.var(axis=(2, 3), ddof=1)
    den = jnp.sqrt(rv * tv + eps)
    npcc = num / (den + eps)
    return 1.0 - npcc.mean()


if __name__ == "__main__":
    key = jax.random.PRNGKey(0)
    k1, k2, k3, k4 = jax.random.split(key, 4)

    # Test 1: default (small) path — B=2, C=4, 16x16 images.
    B, C, H, W = 2, 4, 16, 16
    recon = jax.random.normal(k1, (B, C, H, W), dtype=jnp.float32)
    target = 0.7 * recon + 0.3 * jax.random.normal(k2, (B, C, H, W), jnp.float32)
    loss = jax.block_until_ready(npcc_loss(recon, target))
    ref = jax.block_until_ready(_npcc_loss_ref(recon, target))
    assert jnp.allclose(loss, ref, atol=1e-4, rtol=1e-4), (loss, ref)

    # Test 2: exercises the multi-tile path (spatial tail mask + partial row tile).
    B2, C2, H2, W2 = 3, 5, 20, 20
    recon2 = jax.random.normal(k3, (B2, C2, H2, W2), dtype=jnp.float32)
    target2 = 0.5 * recon2 + 0.5 * jax.random.normal(k4, (B2, C2, H2, W2), jnp.float32)
    loss2 = jax.block_until_ready(
        npcc_loss(recon2, target2, row_tile=8, spatial_tile=128))
    ref2 = jax.block_until_ready(_npcc_loss_ref(recon2, target2))
    assert jnp.allclose(loss2, ref2, atol=1e-4, rtol=1e-4), (loss2, ref2)

    print("KERNEL_OK")
</pallas_src>

<mosaic_0001>
module attributes {stable_mosaic.version = 11 : i64} {
  func.func @_npcc_kernel(%arg0: i32, %arg1: i32, %arg2: memref<8x256xf32, #tpu.memory_space<vmem>>, %arg3: memref<8x256xf32, #tpu.memory_space<vmem>>, %arg4: memref<8x1xf32, #tpu.memory_space<vmem>>, %arg5: memref<8x1xf32, #tpu.memory_space<vmem>>, %arg6: memref<8x1xf32, #tpu.memory_space<vmem>>, %arg7: memref<8x1xf32, #tpu.memory_space<vmem>>, %arg8: memref<8x1xf32, #tpu.memory_space<vmem>>, %arg9: memref<8x1xf32, #tpu.memory_space<vmem>>) attributes {dimension_semantics = [#tpu.dimension_semantics<parallel>, #tpu.dimension_semantics<arbitrary>], iteration_bounds = array<i64: 1, 1>, scalar_prefetch = 0 : i64, scratch_operands = 5 : i64, tpu.core_type = #tpu.core_type<tc>, window_params = [{transform_indices = @transform_0, window_bounds = array<i64: 8, 256>}, {transform_indices = @transform_1, window_bounds = array<i64: 8, 256>}, {transform_indices = @transform_2, window_bounds = array<i64: 8, 1>}]} {
    %c0_i32 = arith.constant 0 : i32
    %0 = arith.cmpi eq, %arg1, %c0_i32 : i32
    %1 = arith.extui %0 : i1 to i32
    %c0_i32_0 = arith.constant 0 : i32
    %2 = arith.cmpi ne, %1, %c0_i32_0 : i32
    scf.if %2 {
      %cst_30 = arith.constant 0.000000e+00 : f32
      %36 = vector.broadcast %cst_30 : f32 to vector<8x1xf32>
      %c0_31 = arith.constant 0 : index
      %c0_32 = arith.constant 0 : index
      %37 = vector.load %arg5[%c0_31, %c0_32] : memref<8x1xf32, #tpu.memory_space<vmem>>, vector<8x1xf32>
      tpu.vector_store %arg5[%c0_31, %c0_32], %36 {strides = array<i32>} : memref<8x1xf32, #tpu.memory_space<vmem>>, vector<8x1xf32>,
      %cst_33 = arith.constant 0.000000e+00 : f32
      %38 = vector.broadcast %cst_33 : f32 to vector<8x1xf32>
      %c0_34 = arith.constant 0 : index
      %c0_35 = arith.constant 0 : index
      %39 = vector.load %arg6[%c0_34, %c0_35] : memref<8x1xf32, #tpu.memory_space<vmem>>, vector<8x1xf32>
      tpu.vector_store %arg6[%c0_34, %c0_35], %38 {strides = array<i32>} : memref<8x1xf32, #tpu.memory_space<vmem>>, vector<8x1xf32>,
      %cst_36 = arith.constant 0.000000e+00 : f32
      %40 = vector.broadcast %cst_36 : f32 to vector<8x1xf32>
      %c0_37 = arith.constant 0 : index
      %c0_38 = arith.constant 0 : index
      %41 = vector.load %arg7[%c0_37, %c0_38] : memref<8x1xf32, #tpu.memory_space<vmem>>, vector<8x1xf32>
      tpu.vector_store %arg7[%c0_37, %c0_38], %40 {strides = array<i32>} : memref<8x1xf32, #tpu.memory_space<vmem>>, vector<8x1xf32>,
      %cst_39 = arith.constant 0.000000e+00 : f32
      %42 = vector.broadcast %cst_39 : f32 to vector<8x1xf32>
      %c0_40 = arith.constant 0 : index
      %c0_41 = arith.constant 0 : index
      %43 = vector.load %arg8[%c0_40, %c0_41] : memref<8x1xf32, #tpu.memory_space<vmem>>, vector<8x1xf32>
      tpu.vector_store %arg8[%c0_40, %c0_41], %42 {strides = array<i32>} : memref<8x1xf32, #tpu.memory_space<vmem>>, vector<8x1xf32>,
      %cst_42 = arith.constant 0.000000e+00 : f32
      %44 = vector.broadcast %cst_42 : f32 to vector<8x1xf32>
      %c0_43 = arith.constant 0 : index
      %c0_44 = arith.constant 0 : index
      %45 = vector.load %arg9[%c0_43, %c0_44] : memref<8x1xf32, #tpu.memory_space<vmem>>, vector<8x1xf32>
      tpu.vector_store %arg9[%c0_43, %c0_44], %44 {strides = array<i32>} : memref<8x1xf32, #tpu.memory_space<vmem>>, vector<8x1xf32>,
    } else {
    }
    %c0 = arith.constant 0 : index
    %c0_1 = arith.constant 0 : index
    %3 = vector.load %arg2[%c0, %c0_1] : memref<8x256xf32, #tpu.memory_space<vmem>>, vector<8x256xf32>
    %c0_2 = arith.constant 0 : index
    %c0_3 = arith.constant 0 : index
    %4 = vector.load %arg3[%c0_2, %c0_3] : memref<8x256xf32, #tpu.memory_space<vmem>>, vector<8x256xf32>
    %c0_4 = arith.constant 0 : index
    %c0_5 = arith.constant 0 : index
    %5 = vector.load %arg5[%c0_4, %c0_5] : memref<8x1xf32, #tpu.memory_space<vmem>>, vector<8x1xf32>
    %cst = arith.constant dense<0.000000e+00> : vector<8xf32>
    %6 = vector.multi_reduction <add>, %3, %cst [1] : vector<8x256xf32> to vector<8xf32>
    %7 = vector.shape_cast %6 : vector<8xf32> to vector<8x1xf32>
    %8 = arith.addf %5, %7 : vector<8x1xf32>
    %c0_6 = arith.constant 0 : index
    %c0_7 = arith.constant 0 : index
    %9 = vector.load %arg5[%c0_6, %c0_7] : memref<8x1xf32, #tpu.memory_space<vmem>>, vector<8x1xf32>
    tpu.vector_store %arg5[%c0_6, %c0_7], %8 {strides = array<i32>} : memref<8x1xf32, #tpu.memory_space<vmem>>, vector<8x1xf32>,
    %c0_8 = arith.constant 0 : index
    %c0_9 = arith.constant 0 : index
    %10 = vector.load %arg6[%c0_8, %c0_9] : memref<8x1xf32, #tpu.memory_space<vmem>>, vector<8x1xf32>
    %cst_10 = arith.constant dense<0.000000e+00> : vector<8xf32>
    %11 = vector.multi_reduction <add>, %4, %cst_10 [1] : vector<8x256xf32> to vector<8xf32>
    %12 = vector.shape_cast %11 : vector<8xf32> to vector<8x1xf32>
    %13 = arith.addf %10, %12 : vector<8x1xf32>
    %c0_11 = arith.constant 0 : index
    %c0_12 = arith.constant 0 : index
    %14 = vector.load %arg6[%c0_11, %c0_12] : memref<8x1xf32, #tpu.memory_space<vmem>>, vector<8x1xf32>
    tpu.vector_store %arg6[%c0_11, %c0_12], %13 {strides = array<i32>} : memref<8x1xf32, #tpu.memory_space<vmem>>, vector<8x1xf32>,
    %c0_13 = arith.constant 0 : index
    %c0_14 = arith.constant 0 : index
    %15 = vector.load %arg7[%c0_13, %c0_14] : memref<8x1xf32, #tpu.memory_space<vmem>>, vector<8x1xf32>
    %16 = arith.mulf %3, %3 : vector<8x256xf32>
    %cst_15 = arith.constant dense<0.000000e+00> : vector<8xf32>
    %17 = vector.multi_reduction <add>, %16, %cst_15 [1] : vector<8x256xf32> to vector<8xf32>
    %18 = vector.shape_cast %17 : vector<8xf32> to vector<8x1xf32>
    %19 = arith.addf %15, %18 : vector<8x1xf32>
    %c0_16 = arith.constant 0 : index
    %c0_17 = arith.constant 0 : index
    %20 = vector.load %arg7[%c0_16, %c0_17] : memref<8x1xf32, #tpu.memory_space<vmem>>, vector<8x1xf32>
    tpu.vector_store %arg7[%c0_16, %c0_17], %19 {strides = array<i32>} : memref<8x1xf32, #tpu.memory_space<vmem>>, vector<8x1xf32>,
    %c0_18 = arith.constant 0 : index
    %c0_19 = arith.constant 0 : index
    %21 = vector.load %arg8[%c0_18, %c0_19] : memref<8x1xf32, #tpu.memory_space<vmem>>, vector<8x1xf32>
    %22 = arith.mulf %4, %4 : vector<8x256xf32>
    %cst_20 = arith.constant dense<0.000000e+00> : vector<8xf32>
    %23 = vector.multi_reduction <add>, %22, %cst_20 [1] : vector<8x256xf32> to vector<8xf32>
    %24 = vector.shape_cast %23 : vector<8xf32> to vector<8x1xf32>
    %25 = arith.addf %21, %24 : vector<8x1xf32>
    %c0_21 = arith.constant 0 : index
    %c0_22 = arith.constant 0 : index
    %26 = vector.load %arg8[%c0_21, %c0_22] : memref<8x1xf32, #tpu.memory_space<vmem>>, vector<8x1xf32>
    tpu.vector_store %arg8[%c0_21, %c0_22], %25 {strides = array<i32>} : memref<8x1xf32, #tpu.memory_space<vmem>>, vector<8x1xf32>,
    %c0_23 = arith.constant 0 : index
    %c0_24 = arith.constant 0 : index
    %27 = vector.load %arg9[%c0_23, %c0_24] : memref<8x1xf32, #tpu.memory_space<vmem>>, vector<8x1xf32>
    %28 = arith.mulf %3, %4 : vector<8x256xf32>
    %cst_25 = arith.constant dense<0.000000e+00> : vector<8xf32>
    %29 = vector.multi_reduction <add>, %28, %cst_25 [1] : vector<8x256xf32> to vector<8xf32>
    %30 = vector.shape_cast %29 : vector<8xf32> to vector<8x1xf32>
    %31 = arith.addf %27, %30 : vector<8x1xf32>
    %c0_26 = arith.constant 0 : index
    %c0_27 = arith.constant 0 : index
    %32 = vector.load %arg9[%c0_26, %c0_27] : memref<8x1xf32, #tpu.memory_space<vmem>>, vector<8x1xf32>
    tpu.vector_store %arg9[%c0_26, %c0_27], %31 {strides = array<i32>} : memref<8x1xf32, #tpu.memory_space<vmem>>, vector<8x1xf32>,
    %c0_i32_28 = arith.constant 0 : i32
    %33 = arith.cmpi eq, %arg1, %c0_i32_28 : i32
    %34 = arith.extui %33 : i1 to i32
    %c0_i32_29 = arith.constant 0 : i32
    %35 = arith.cmpi ne, %34, %c0_i32_29 : i32
    scf.if %35 {
      %c0_30 = arith.constant 0 : index
      %c0_31 = arith.constant 0 : index
      %36 = vector.load %arg5[%c0_30, %c0_31] : memref<8x1xf32, #tpu.memory_space<vmem>>, vector<8x1xf32>
      %c0_32 = arith.constant 0 : index
      %c0_33 = arith.constant 0 : index
      %37 = vector.load %arg6[%c0_32, %c0_33] : memref<8x1xf32, #tpu.memory_space<vmem>>, vector<8x1xf32>
      %cst_34 = arith.constant 3.906250e-03 : f32
      %38 = vector.broadcast %cst_34 : f32 to vector<8x1xf32>
      %39 = arith.mulf %36, %38 : vector<8x1xf32>
      %cst_35 = arith.constant 3.906250e-03 : f32
      %40 = vector.broadcast %cst_35 : f32 to vector<8x1xf32>
      %41 = arith.mulf %37, %40 : vector<8x1xf32>
      %c0_36 = arith.constant 0 : index
      %c0_37 = arith.constant 0 : index
      %42 = vector.load %arg9[%c0_36, %c0_37] : memref<8x1xf32, #tpu.memory_space<vmem>>, vector<8x1xf32>
      %43 = arith.mulf %36, %41 : vector<8x1xf32>
      %44 = arith.subf %42, %43 : vector<8x1xf32>
      %cst_38 = arith.constant 3.906250e-03 : f32
      %45 = vector.broadcast %cst_38 : f32 to vector<8x1xf32>
      %46 = arith.mulf %44, %45 : vector<8x1xf32>
      %c0_39 = arith.constant 0 : index
      %c0_40 = arith.constant 0 : index
      %47 = vector.load %arg7[%c0_39, %c0_40] : memref<8x1xf32, #tpu.memory_space<vmem>>, vector<8x1xf32>
      %48 = arith.mulf %36, %39 : vector<8x1xf32>
      %49 = arith.subf %47, %48 : vector<8x1xf32>
      %cst_41 = arith.constant 0.00392156886 : f32
      %50 = vector.broadcast %cst_41 : f32 to vector<8x1xf32>
      %51 = arith.mulf %49, %50 : vector<8x1xf32>
      %cst_42 = arith.constant 0.000000e+00 : f32
      %52 = vector.broadcast %cst_42 : f32 to vector<8x1xf32>
      %53 = arith.maximumf %51, %52 : vector<8x1xf32>
      %c0_43 = arith.constant 0 : index
      %c0_44 = arith.constant 0 : index
      %54 = vector.load %arg8[%c0_43, %c0_44] : memref<8x1xf32, #tpu.memory_space<vmem>>, vector<8x1xf32>
      %55 = arith.mulf %37, %41 : vector<8x1xf32>
      %56 = arith.subf %54, %55 : vector<8x1xf32>
      %cst_45 = arith.constant 0.00392156886 : f32
      %57 = vector.broadcast %cst_45 : f32 to vector<8x1xf32>
      %58 = arith.mulf %56, %57 : vector<8x1xf32>
      %cst_46 = arith.constant 0.000000e+00 : f32
      %59 = vector.broadcast %cst_46 : f32 to vector<8x1xf32>
      %60 = arith.maximumf %58, %59 : vector<8x1xf32>
      %61 = arith.mulf %53, %60 : vector<8x1xf32>
      %cst_47 = arith.constant 9.99999993E-9 : f32
      %62 = vector.broadcast %cst_47 : f32 to vector<8x1xf32>
      %63 = arith.addf %61, %62 : vector<8x1xf32>
      %64 = math.sqrt %63 : vector<8x1xf32>
      %cst_48 = arith.constant 9.99999993E-9 : f32
      %65 = vector.broadcast %cst_48 : f32 to vector<8x1xf32>
      %66 = arith.addf %64, %65 : vector<8x1xf32>
      %67 = arith.divf %46, %66 : vector<8x1xf32>
      %c0_49 = arith.constant 0 : index
      %c0_50 = arith.constant 0 : index
      %68 = vector.load %arg4[%c0_49, %c0_50] : memref<8x1xf32, #tpu.memory_space<vmem>>, vector<8x1xf32>
      tpu.vector_store %arg4[%c0_49, %c0_50], %67 {strides = array<i32>} : memref<8x1xf32, #tpu.memory_space<vmem>>, vector<8x1xf32>,
    } else {
    }
    return
  }
  func.func @transform_0(%arg0: i32, %arg1: i32) -> (i32, i32) {
    %c0_i32 = arith.constant 0 : i32
    return %arg0, %arg1 : i32, i32
  }
  func.func @transform_1(%arg0: i32, %arg1: i32) -> (i32, i32) {
    %c0_i32 = arith.constant 0 : i32
    return %arg0, %arg1 : i32, i32
  }
  func.func @transform_2(%arg0: i32, %arg1: i32) -> (i32, i32) {
    %c0_i32 = arith.constant 0 : i32
    %c0_i32_0 = arith.constant 0 : i32
    return %arg0, %c0_i32 : i32, i32
  }
}

</mosaic_0001>

<llo_original>
// kernel: tpu_custom_call.1
$region0: #{tpu_custom_call.1}
  #allocation0 [shape = 'u32[]', space=smem, size = 0x4, offset = 0x4, fixed_abs, tag = 'smem constant byte address 0x4 - core index']
  #allocation1 [shape = 'u32[144,128]{1,0:T(1,128)}', space=vmem, size = 0x12000, scoped, tag = 'internal scratch']
  #allocation2 [shape = 'f32[8,1]{1,0:T(8,128)}', space=vmem, size = 0x1000, scoped, tag = 'scratch operand']
  #allocation3 [shape = 'f32[8,1]{1,0:T(8,128)}', space=vmem, size = 0x1000, scoped, tag = 'scratch operand']
  #allocation4 [shape = 'f32[8,1]{1,0:T(8,128)}', space=vmem, size = 0x1000, scoped, tag = 'scratch operand']
  #allocation5 [shape = 'f32[8,1]{1,0:T(8,128)}', space=vmem, size = 0x1000, scoped, tag = 'scratch operand']
  #allocation6 [shape = 'f32[8,1]{1,0:T(8,128)}', space=vmem, size = 0x1000, scoped, tag = 'scratch operand']
  %s0 = inlined_call_operand.hbm [shape: f32[8,256], index: 0, kind: input, shape index: {}]
  %s1 = inlined_call_operand.hbm [shape: f32[8,256], index: 1, kind: input, shape index: {}]
  %s2 = inlined_call_operand.vmem [shape: f32[8,1], index: 2, kind: output, shape index: {}]
  %s3 = sld [smem:[#allocation0]]
  $region34: #{tpu_custom_call.1} parent=0
    _
  %s5 = ssub.s32 1, %s3
  %s6 = scalar_select 0, %s5, %s3
  $region1: #{tpu_custom_call.1} parent=0
    #allocation7 [shape = 'u8[8192]{0}', space=vmem, size = 0x2000, scoped, tag = 'input window, operand 0, single buffered']
    #allocation8 [shape = 's32[1]{0}', space=sflag, size = 0x4, scoped, tag = 'scoped memory for tpu_custom_call.1']
    #allocation9 [shape = 'u8[8192]{0}', space=vmem, size = 0x2000, scoped, tag = 'input window, operand 1, single buffered']
    #allocation10 [shape = 's32[1]{0}', space=sflag, size = 0x4, scoped, tag = 'scoped memory for tpu_custom_call.1']
    %7 = vsyncpa [#allocation8], 0
    %8 = vsyncpa [#allocation10], 0
    // Predicated region
    $region2: #{tpu_custom_call.1} parent=1 // pred_check
      _
    $region3: #{tpu_custom_call.1} parent=1 // pred_check_branch
      %10 = sbr.rel (0) target = $region5
    $region4: #{tpu_custom_call.1} parent=1 // pred_region
      %s12 = ssub.s32 256, 256
      %13 = vsyncadd [#allocation8], %s12
      %s15 = sshll.u32 [#allocation7], 4
      %s16 = int_to_ptr.vmem [resolvable:$true] %s15
      %18 = dma.hbm_to_vmem [thread:$0]  %s0, 256, %s16, [#allocation8]
    $region5: #{tpu_custom_call.1} parent=1 // pred_fallthru
      _
    // Predicated region
    $region6: #{tpu_custom_call.1} parent=1 // pred_check
      _
    $region7: #{tpu_custom_call.1} parent=1 // pred_check_branch
      %20 = sbr.rel (0) target = $region9
    $region8: #{tpu_custom_call.1} parent=1 // pred_region
      %s22 = ssub.s32 256, 256
      %23 = vsyncadd [#allocation10], %s22
      %s25 = sshll.u32 [#allocation9], 4
      %s26 = int_to_ptr.vmem [resolvable:$true] %s25
      %28 = dma.hbm_to_vmem [thread:$0]  %s1, 256, %s26, [#allocation10]
    $region9: #{tpu_custom_call.1} parent=1 // pred_fallthru
      _
    // Predicated region
    $region10: #{tpu_custom_call.1} parent=1 // pred_check
      _
    $region11: #{tpu_custom_call.1} parent=1 // pred_check_branch
      %30 = sbr.rel (0) target = $region13
    $region12: #{tpu_custom_call.1} parent=1 // pred_region
      %31 = dma.done [#allocation8], 256
    $region13: #{tpu_custom_call.1} parent=1 // pred_fallthru
      _
    // Predicated region
    $region14: #{tpu_custom_call.1} parent=1 // pred_check
      _
    $region15: #{tpu_custom_call.1} parent=1 // pred_check_branch
      %33 = sbr.rel (0) target = $region17
    $region16: #{tpu_custom_call.1} parent=1 // pred_region
      %34 = dma.done [#allocation10], 256
    $region17: #{tpu_custom_call.1} parent=1 // pred_fallthru
      _
    %p35 = scmp.eq.s32.totalorder 0, 0
    // Predicated region
    $region18: #{tpu_custom_call.1} parent=1 // pred_check
      %p36 = pneg %p35
    $region19: #{tpu_custom_call.1} parent=1 // pred_check_branch
      %38 = sbr.rel (%p36) target = $region21
    $region20: #{tpu_custom_call.1} parent=1 // pred_region
      %vm39 = vcmask 7168
      %40 = vst.msk [vmem:[#allocation2] sm:$0xff] %vm39, 0.0
      %41 = vst.msk [vmem:[#allocation3] sm:$0xff] %vm39, 0.0
      %42 = vst.msk [vmem:[#allocation4] sm:$0xff] %vm39, 0.0
      %43 = vst.msk [vmem:[#allocation5] sm:$0xff] %vm39, 0.0
      %44 = vst.msk [vmem:[#allocation6] sm:$0xff] %vm39, 0.0
    $region21: #{tpu_custom_call.1} parent=1 // pred_fallthru
      _
    %v45 = vld [vmem:[#allocation7] sm:$0xff]
    %v46 = vld [vmem:[#allocation7 + $0x8] sm:$0xff]
    %v47 = vld [vmem:[#allocation9] sm:$0xff]
    %v48 = vld [vmem:[#allocation9 + $0x8] sm:$0xff]
    %v49 = vld [vmem:[#allocation2] sm:$0xff]
    %v50 = vadd.f32 %v45, %v46
    %51 = vadd.xlane.f32.xlu0 %v50
    %v52 = vpop.xlane.xlu0 %51
    %v53 = vadd.f32 %v49, %v52
    %vm54 = vcmask 7168
    %55 = vst.msk [vmem:[#allocation2] sm:$0xff] %vm54, %v53
    %v56 = vld [vmem:[#allocation3] sm:$0xff]
    %v57 = vadd.f32 %v47, %v48
    %58 = vadd.xlane.f32.xlu0 %v57
    %v59 = vpop.xlane.xlu0 %58
    %v60 = vadd.f32 %v56, %v59
    %61 = vst.msk [vmem:[#allocation3] sm:$0xff] %vm54, %v60
    %v62 = vld [vmem:[#allocation4] sm:$0xff]
    %v63 = vmul.f32 %v45, %v45
    %v64 = vmul.f32 %v46, %v46
    %v65 = vadd.f32 %v63, %v64
    %66 = vadd.xlane.f32.xlu0 %v65
    %v67 = vpop.xlane.xlu0 %66
    %v68 = vadd.f32 %v62, %v67
    %69 = vst.msk [vmem:[#allocation4] sm:$0xff] %vm54, %v68
    %v70 = vld [vmem:[#allocation5] sm:$0xff]
    %v71 = vmul.f32 %v47, %v47
    %v72 = vmul.f32 %v48, %v48
    %v73 = vadd.f32 %v71, %v72
    %74 = vadd.xlane.f32.xlu0 %v73
    %v75 = vpop.xlane.xlu0 %74
    %v76 = vadd.f32 %v70, %v75
    %77 = vst.msk [vmem:[#allocation5] sm:$0xff] %vm54, %v76
    %v78 = vld [vmem:[#allocation6] sm:$0xff]
    %v79 = vmul.f32 %v45, %v47
    %v80 = vmul.f32 %v46, %v48
    %v81 = vadd.f32 %v79, %v80
    %82 = vadd.xlane.f32.xlu0 %v81
    %v83 = vpop.xlane.xlu0 %82
    %v84 = vadd.f32 %v78, %v83
    %85 = vst.msk [vmem:[#allocation6] sm:$0xff] %vm54, %v84
    // Predicated region
    $region22: #{tpu_custom_call.1} parent=1 // pred_check
      %p86 = pneg %p35
    $region23: #{tpu_custom_call.1} parent=1 // pred_check_branch
      %88 = sbr.rel (%p86) target = $region25
    $region24: #{tpu_custom_call.1} parent=1 // pred_region
      %v89 = vld [vmem:[#allocation2] sm:$0xff]
      %v90 = vld [vmem:[#allocation3] sm:$0xff]
      %v91 = vmul.f32 %v89, 0.00390625
      %v92 = vmul.f32 %v90, 0.00390625
      %v93 = vld [vmem:[#allocation6] sm:$0xff]
      %v94 = vmul.f32 %v89, %v92
      %v95 = vsub.f32 %v93, %v94
      %v96 = vmul.f32 %v95, 0.00390625
      %v97 = vld [vmem:[#allocation4] sm:$0xff]
      %v98 = vmul.f32 %v89, %v91
      %v99 = vsub.f32 %v97, %v98
      %v100 = vmul.f32 %v99, 0.003921569
      %v101 = vmax.f32 %v100, 0.0
      %v102 = vld [vmem:[#allocation5] sm:$0xff]
      %v103 = vmul.f32 %v90, %v92
      %v104 = vsub.f32 %v102, %v103
      %v105 = vmul.f32 %v104, 0.003921569
      %v106 = vmax.f32 %v105, 0.0
      %v107 = vmul.f32 %v101, %v106
      %v108 = vadd.f32 %v107, 1e-08
      %v109 = vrsqrt.pop %v108
      %v110 = vmul.f32 %v108, %v109
      %vm111 = vcmp.eq.f32.partialorder %v108, inf
      %v112 = vsel %vm111, %v108, %v110
      %vm113 = vcmp.eq.f32.partialorder %v108, 0.0
      %v114 = vand.u32 %v108, 2147483648
      %v115 = vsel %vm113, %v114, %v112
      %v116 = vadd.f32 %v115, 1e-08
      %v117 = vrcp.pop %v116
      %v118 = vmul.f32 %v96, %v117
      %119 = vst.msk [vmem:[%s2] sm:$0xff] %vm54, %v118
    $region25: #{tpu_custom_call.1} parent=1 // pred_fallthru
      _
    // Predicated region
    $region26: #{tpu_custom_call.1} parent=1 // pred_check
      _
    $region27: #{tpu_custom_call.1} parent=1 // pred_check_branch
      %121 = sbr.rel (0) target = $region29
    $region28: #{tpu_custom_call.1} parent=1 // pred_region
      _
    $region29: #{tpu_custom_call.1} parent=1 // pred_fallthru
      _
    // Predicated region
    $region30: #{tpu_custom_call.1} parent=1 // pred_check
      _
    $region31: #{tpu_custom_call.1} parent=1 // pred_check_branch
      %123 = sbr.rel (0) target = $region33
    $region32: #{tpu_custom_call.1} parent=1 // pred_region
      _
    $region33: #{tpu_custom_call.1} parent=1 // pred_fallthru
      _
    %124 = vsyncpa [#allocation8], 1
    %125 = vsyncpa [#allocation10], 1

</llo_original>
